<compile_context>
chip_gen: v6e
topology: v6e:2x2x1
jax: 0.10.0
libtpu: 0.0.40
codegen_flags: <defaults>
</compile_context>

<pallas_src>
import functools

import jax
import jax.numpy as jnp
from jax import lax
from jax.experimental import pallas as pl
from jax.experimental.pallas import tpu as pltpu

EPS = 1e-5  # torch.nn.InstanceNorm2d default eps


# ---------------------------------------------------------------------------
# Generation-aware sizing helpers
# ---------------------------------------------------------------------------
def _vmem_budget_bytes():
    cap = 64 * 1024 * 1024
    try:
        info = pltpu.get_tpu_info()
        cap = int(getattr(info, "vmem_capacity_bytes", cap))
    except Exception:
        pass
    return int(cap * 3 // 4)           # always below physical on every gen


def _estimate_vmem_bytes(sh, H, W, C, Cs, mm_bytes):
    """Rough per-grid-step VMEM estimate for strip height `sh` (f32 I/O)."""
    f32 = 4
    sl, ra_w, rw_w = sh * W, (sh + 2) * W, (sh + 4) * W
    io = 2 * (2 * C * sl * f32)                       # x + out blocks (double buffered)
    seg = 2 * Cs * (H + 4) * W * f32                  # full-image seg block (double buffered)
    wts = 2 * (9 * C * Cs + 18 * C * C) * mm_bytes
    inter = (3 * Cs * rw_w * mm_bytes                 # seg window + left/right shifts
             + 3 * Cs * ra_w * mm_bytes               # per-kh patch concat (conv 1)
             + C * ra_w * (2 * f32 + 2 * mm_bytes)    # actv accumulator / mask / cast
             + 3 * C * sl * mm_bytes                  # per-kh patch concat (conv 2)
             + 2 * C * sl * 2 * f32                   # gamma/beta accumulator
             + C * sl * 2 * f32)                      # normalized-x temporaries
    return int(1.25 * (io + seg + wts + inter))


def _pick_strip_rows(H, W, C, Cs, mm_bytes, budget):
    """Largest strip height dividing H whose lane width (rows*W) is a multiple
    of 128 (or the whole image) and whose VMEM estimate fits the budget."""
    cands = sorted({h for h in range(1, H + 1)
                    if H % h == 0 and (h == H or (h * W) % 128 == 0)},
                   reverse=True)
    for sh in cands:
        if _estimate_vmem_bytes(sh, H, W, C, Cs, mm_bytes) <= budget:
            return sh
    return cands[-1]


# ---------------------------------------------------------------------------
# Pass 1: instance-norm statistics (full-image mean / rstd per (n, c))
# ---------------------------------------------------------------------------
def _instnorm_stats_kernel(x_ref, mean_ref, rstd_ref, sum_sc, ssq_sc, *, inv_hw):
    s = pl.program_id(1)

    @pl.when(s == 0)
    def _():
        sum_sc[...] = jnp.zeros_like(sum_sc)
        ssq_sc[...] = jnp.zeros_like(ssq_sc)

    x = x_ref[0].astype(jnp.float32)                      # (C, strip*W)
    sum_sc[...] += jnp.sum(x, axis=1, keepdims=True)
    ssq_sc[...] += jnp.sum(x * x, axis=1, keepdims=True)

    @pl.when(s == pl.num_programs(1) - 1)
    def _():
        mean = sum_sc[...] * inv_hw
        var = ssq_sc[...] * inv_hw - mean * mean          # biased variance
        mean_ref[0] = mean
        rstd_ref[0] = lax.rsqrt(jnp.maximum(var, 0.0) + EPS)


# ---------------------------------------------------------------------------
# Pass 2: fused shared-conv + ReLU + gamma/beta convs + SPADE modulation
# ---------------------------------------------------------------------------
def _col_index(length, W):
    """Column index (w coordinate) of each flattened (row*W + w) position."""
    pos = lax.broadcasted_iota(jnp.int32, (1, length), 1)
    if W & (W - 1) == 0:                                  # power of two (16, 128, 256, ...)
        return pos & (W - 1)
    return pos % W


def _conv3x3_flat(win, w_ref, b_ref, *, W, r_out):
    """SAME 3x3 conv on a lane-dense (Cin, r_win*W) window.

    Row taps are static lane slices of the window (no roll); the two column
    taps are a single-step pltpu.roll each with an iota border mask.  The conv
    is 3 accumulating MXU matmuls grouped by kernel row (K = 3*Cin); the patch
    matrix is built in the (bf16) matmul dtype.  Returns (Cout, r_out*W) f32
    with the bias added (no activation).
    """
    lw = win.shape[1]
    col = _col_index(lw, W)
    left = jnp.where(col != 0, pltpu.roll(win, shift=1, axis=1), 0).astype(win.dtype)
    right = jnp.where(col != W - 1, pltpu.roll(win, shift=lw - 1, axis=1), 0).astype(win.dtype)
    prec = lax.Precision.HIGHEST if win.dtype == jnp.float32 else None

    acc = None
    for kh in range(3):                                   # static, unrolled
        lo, hi = kh * W, (kh + r_out) * W
        patches = jnp.concatenate(                        # (3*Cin, r_out*W), kw-major
            [left[:, lo:hi], win[:, lo:hi], right[:, lo:hi]], axis=0)
        d = jnp.dot(w_ref[kh], patches, precision=prec,
                    preferred_element_type=jnp.float32)
        acc = d if acc is None else acc + d
    return acc + b_ref[...]


def _spade_strip_kernel(x_ref, seg_ref, mean_ref, rstd_ref,
                        ws_ref, bs_ref, wgb_ref, bgb_ref, o_ref, *, H, W, Sh):
    # x_ref:    (1, C,  Sh*W)        strip of x
    # seg_ref:  (1, Cs, (H+4)*W)     full segmap with a 2-row zero halo top/bottom
    # mean_ref: (1, C, 1)            full-image instance-norm mean
    # rstd_ref: (1, C, 1)            full-image instance-norm 1/sqrt(var+eps)
    # ws_ref:   (3, C, 3*Cs)         mlp_shared weights, grouped by kernel row
    # bs_ref:   (C, 1)
    # wgb_ref:  (3, 2C, 3C)          [gamma; beta] weights, grouped by kernel row
    # bgb_ref:  (2C, 1)
    # o_ref:    (1, C, Sh*W)
    s = pl.program_id(1)
    r0 = s * Sh                           # first output image row of this strip
    base = s * (Sh * W)                   # flat offset of that row (also the
    if (Sh * W) % 128 == 0:               # padded-seg window start: +2 pad rows
        base = pl.multiple_of(base, 128)  # cancel the -2 row conv halo)
    mdt = ws_ref.dtype                    # matmul operand dtype (bf16 by default)
    ra = Sh + 2                           # actv rows: strip + 1-row halo each side

    # --- mlp_shared: 3x3 conv + bias + ReLU over the (Sh+4)-row seg window ----
    seg_win = seg_ref[0, :, pl.ds(base, (Sh + 4) * W)].astype(mdt)
    actv = jnp.maximum(_conv3x3_flat(seg_win, ws_ref, bs_ref, W=W, r_out=ra), 0.0)

    # Zero the actv halo rows that fall outside the image: this reproduces the
    # zero padding the gamma/beta convs would see at the top/bottom border.
    pos = lax.broadcasted_iota(jnp.int32, (1, ra * W), 1)
    valid = ((pos >= W) | (r0 > 0)) & ((pos < (ra - 1) * W) | (r0 + Sh < H))
    actv = jnp.where(valid, actv, 0.0).astype(mdt)        # cast BEFORE patches

    # --- mlp_gamma / mlp_beta as one merged conv -------------------------------
    gb = _conv3x3_flat(actv, wgb_ref, bgb_ref, W=W, r_out=Sh)   # (2C, Sh*W) f32
    C = x_ref.shape[1]
    gamma, beta = gb[:C], gb[C:]

    # --- param-free instance norm (precomputed stats) + modulation -------------
    xv = x_ref[0].astype(jnp.float32)
    norm = (xv - mean_ref[0]) * rstd_ref[0]
    o_ref[0] = (norm * gamma + beta).astype(o_ref.dtype)


# ---------------------------------------------------------------------------
# Parameter packing (one-time): OIHW -> per-kernel-row matmul layout
# ---------------------------------------------------------------------------
def prepare_spade_params(raw, matmul_dtype=jnp.bfloat16):
    """Pack raw PyTorch-layout params.  matmul_dtype=bf16 (default) is the MXU
    fast path on v5e/v6e/v7x (f32 accumulation in-kernel); use jnp.float32 for
    a bit-tight validation path."""
    w_s, b_s = raw["w_shared"], raw["b_shared"]
    w_g, b_g = raw["w_gamma"], raw["b_gamma"]
    w_b, b_b = raw["w_beta"], raw["b_beta"]
    C = w_g.shape[0]

    def group_kh(w):  # (Co, Ci, 3, 3) -> (3, Co, 3*Ci), column index = kw*Ci + ci
        co, ci = w.shape[0], w.shape[1]
        return jnp.transpose(w, (2, 0, 3, 1)).reshape(3, co, 3 * ci).astype(matmul_dtype)

    return {
        "w_shared": group_kh(w_s),                                    # (3, C, 3*Cs)
        "b_shared": b_s.reshape(C, 1).astype(jnp.float32),            # (C, 1)
        "w_gb": jnp.concatenate([group_kh(w_g), group_kh(w_b)], axis=1),  # (3, 2C, 3C)
        "b_gb": jnp.concatenate([b_g, b_b]).reshape(2 * C, 1).astype(jnp.float32),
    }


# ---------------------------------------------------------------------------
# Wrapper
# ---------------------------------------------------------------------------
def spade_forward(x, segmap, params, *, strip_rows=None, out_dtype=None):
    N, C, H, W = x.shape
    Cs = segmap.shape[1]
    HW = H * W
    if out_dtype is None:
        out_dtype = x.dtype
    mm_bytes = jnp.dtype(params["w_shared"].dtype).itemsize
    budget = _vmem_budget_bytes()
    if strip_rows is None:
        strip_rows = _pick_strip_rows(H, W, C, Cs, mm_bytes, (budget * 4) // 5)
    assert H % strip_rows == 0 and (strip_rows == H or (strip_rows * W) % 128 == 0), (
        "strip_rows must divide H and give a 128-multiple lane width (or equal H)")
    n_strips = H // strip_rows
    sl = strip_rows * W                                  # lane width of a strip block

    # Lane-dense flat views (metadata-only on contiguous NCHW); no channel pad,
    # no spatial pad of x.  segmap gets a 2-row zero halo top/bottom (small).
    x_f = x.reshape(N, C, HW)
    seg_p = jnp.pad(segmap, ((0, 0), (0, 0), (2, 2), (0, 0))).reshape(N, Cs, (H + 4) * W)

    # --- pass 1: full-image instance-norm statistics ---------------------------
    mean, rstd = pl.pallas_call(
        functools.partial(_instnorm_stats_kernel, inv_hw=1.0 / HW),
        out_shape=(jax.ShapeDtypeStruct((N, C, 1), jnp.float32),
                   jax.ShapeDtypeStruct((N, C, 1), jnp.float32)),
        grid=(N, n_strips),
        in_specs=[pl.BlockSpec((1, C, sl), lambda n, s: (n, 0, s))],
        out_specs=(pl.BlockSpec((1, C, 1), lambda n, s: (n, 0, 0)),
                   pl.BlockSpec((1, C, 1), lambda n, s: (n, 0, 0))),
        scratch_shapes=[pltpu.VMEM((C, 1), jnp.float32),
                        pltpu.VMEM((C, 1), jnp.float32)],
        compiler_params=pltpu.CompilerParams(
            dimension_semantics=("parallel", "arbitrary"),
            vmem_limit_bytes=budget),
    )(x_f)

    # --- pass 2: fused convs + modulation, strips fully parallel ---------------
    # Note: weight/bias blocks have constant index maps so they are fetched once;
    # their duplicate pipeline buffer is a few KiB (mask constant was removed).
    out_f = pl.pallas_call(
        functools.partial(_spade_strip_kernel, H=H, W=W, Sh=strip_rows),
        out_shape=jax.ShapeDtypeStruct((N, C, HW), out_dtype),
        grid=(N, n_strips),
        in_specs=[
            pl.BlockSpec((1, C, sl), lambda n, s: (n, 0, s)),            # x strip
            pl.BlockSpec((1, Cs, (H + 4) * W), lambda n, s: (n, 0, 0)),  # segmap (full)
            pl.BlockSpec((1, C, 1), lambda n, s: (n, 0, 0)),             # mean
            pl.BlockSpec((1, C, 1), lambda n, s: (n, 0, 0)),             # rstd
            pl.BlockSpec((3, C, 3 * Cs), lambda n, s: (0, 0, 0)),        # w_shared
            pl.BlockSpec((C, 1), lambda n, s: (0, 0)),                   # b_shared
            pl.BlockSpec((3, 2 * C, 3 * C), lambda n, s: (0, 0, 0)),     # w_gamma|beta
            pl.BlockSpec((2 * C, 1), lambda n, s: (0, 0)),               # b_gamma|beta
        ],
        out_specs=pl.BlockSpec((1, C, sl), lambda n, s: (n, 0, s)),
        compiler_params=pltpu.CompilerParams(
            dimension_semantics=("parallel", "parallel"),                # 2 TCs on v7x
            vmem_limit_bytes=budget),
    )(x_f, seg_p, mean, rstd, params["w_shared"], params["b_shared"],
      params["w_gb"], params["b_gb"])

    return out_f.reshape(N, C, H, W)


# ---------------------------------------------------------------------------
# Pure-JAX reference (mirrors the PyTorch forward) for correctness checks
# ---------------------------------------------------------------------------
def _conv3x3_ref(x, w_oihw, b):
    y = lax.conv_general_dilated(x, w_oihw, (1, 1), "SAME",
                                 dimension_numbers=("NCHW", "OIHW", "NCHW"),
                                 precision=lax.Precision.HIGHEST)
    return y + b.reshape(1, -1, 1, 1)


def spade_ref(x, segmap, raw):
    mean = x.mean(axis=(2, 3), keepdims=True)
    var = ((x - mean) ** 2).mean(axis=(2, 3), keepdims=True)
    norm = (x - mean) * lax.rsqrt(var + EPS)
    actv = jnp.maximum(_conv3x3_ref(segmap, raw["w_shared"], raw["b_shared"]), 0.0)
    gamma = _conv3x3_ref(actv, raw["w_gamma"], raw["b_gamma"])
    beta = _conv3x3_ref(actv, raw["w_beta"], raw["b_beta"])
    return norm * gamma + beta


if __name__ == "__main__":
    key = jax.random.PRNGKey(0)
    N, norm_nc, label_nc, H, W = 2, 4, 3, 16, 16
    nhidden = norm_nc  # per the module __init__

    ks = jax.random.split(key, 8)
    x = jax.random.normal(ks[0], (N, norm_nc, H, W), jnp.float32)
    segmap = jax.random.normal(ks[1], (N, label_nc, H, W), jnp.float32)

    raw = {
        "w_shared": 0.1 * jax.random.normal(ks[2], (nhidden, label_nc, 3, 3), jnp.float32),
        "b_shared": 0.1 * jax.random.normal(ks[3], (nhidden,), jnp.float32),
        "w_gamma":  0.1 * jax.random.normal(ks[4], (norm_nc, nhidden, 3, 3), jnp.float32),
        "b_gamma":  0.1 * jax.random.normal(ks[5], (norm_nc,), jnp.float32),
        "w_beta":   0.1 * jax.random.normal(ks[6], (norm_nc, nhidden, 3, 3), jnp.float32),
        "b_beta":   0.1 * jax.random.normal(ks[7], (norm_nc,), jnp.float32),
    }

    ref = jax.block_until_ready(spade_ref(x, segmap, raw))

    # 1) f32 matmul path (auto strip height): tight semantic check.
    params_f32 = prepare_spade_params(raw, jnp.float32)
    out = jax.block_until_ready(spade_forward(x, segmap, params_f32))
    assert out.shape == (N, norm_nc, H, W)
    assert jnp.allclose(out, ref, atol=1e-4, rtol=1e-4), "f32 path mismatch vs reference"

    # 2) explicit multi-strip path (exercises the H-strip halo logic).
    out_s = jax.block_until_ready(spade_forward(x, segmap, params_f32, strip_rows=8))
    assert jnp.allclose(out_s, ref, atol=1e-4, rtol=1e-4), "multi-strip mismatch vs reference"

    # 3) default bf16 MXU-operand path (f32 accumulation): looser tolerance —
    #    semantics are already validated by the f32 path above.
    out_bf16 = jax.block_until_ready(spade_forward(x, segmap, prepare_spade_params(raw)))
    assert jnp.allclose(out_bf16, ref, atol=1e-1, rtol=1e-1), "bf16 path mismatch vs reference"

    print("KERNEL_OK")
</pallas_src>

<mosaic_0001>
module attributes {stable_mosaic.version = 11 : i64} {
  func.func @_instnorm_stats_kernel(%arg0: i32, %arg1: i32, %arg2: memref<1x4x256xf32, #tpu.memory_space<vmem>>, %arg3: memref<1x4x1xf32, #tpu.memory_space<vmem>>, %arg4: memref<1x4x1xf32, #tpu.memory_space<vmem>>, %arg5: memref<4x1xf32, #tpu.memory_space<vmem>>, %arg6: memref<4x1xf32, #tpu.memory_space<vmem>>) attributes {dimension_semantics = [#tpu.dimension_semantics<parallel>, #tpu.dimension_semantics<arbitrary>], iteration_bounds = array<i64: 2, 1>, scalar_prefetch = 0 : i64, scratch_operands = 2 : i64, tpu.core_type = #tpu.core_type<tc>, window_params = [{transform_indices = @transform_0, window_bounds = array<i64: 1, 4, 256>}, {transform_indices = @transform_1, window_bounds = array<i64: 1, 4, 1>}, {transform_indices = @transform_2, window_bounds = array<i64: 1, 4, 1>}]} {
    %c0_i32 = arith.constant 0 : i32
    %0 = arith.cmpi eq, %arg1, %c0_i32 : i32
    %1 = arith.extui %0 : i1 to i32
    %c0_i32_0 = arith.constant 0 : i32
    %2 = arith.cmpi ne, %1, %c0_i32_0 : i32
    scf.if %2 {
      %cst_14 = arith.constant 0.000000e+00 : f32
      %19 = vector.broadcast %cst_14 : f32 to vector<4x1xf32>
      %c0_15 = arith.constant 0 : index
      %c0_16 = arith.constant 0 : index
      %20 = vector.load %arg5[%c0_15, %c0_16] : memref<4x1xf32, #tpu.memory_space<vmem>>, vector<4x1xf32>
      tpu.vector_store %arg5[%c0_15, %c0_16], %19 {strides = array<i32>} : memref<4x1xf32, #tpu.memory_space<vmem>>, vector<4x1xf32>,
      %cst_17 = arith.constant 0.000000e+00 : f32
      %21 = vector.broadcast %cst_17 : f32 to vector<4x1xf32>
      %c0_18 = arith.constant 0 : index
      %c0_19 = arith.constant 0 : index
      %22 = vector.load %arg6[%c0_18, %c0_19] : memref<4x1xf32, #tpu.memory_space<vmem>>, vector<4x1xf32>
      tpu.vector_store %arg6[%c0_18, %c0_19], %21 {strides = array<i32>} : memref<4x1xf32, #tpu.memory_space<vmem>>, vector<4x1xf32>,
    } else {
    }
    %c0 = arith.constant 0 : index
    %c0_1 = arith.constant 0 : index
    %c0_2 = arith.constant 0 : index
    %3 = vector.load %arg2[%c0, %c0_1, %c0_2] : memref<1x4x256xf32, #tpu.memory_space<vmem>>, vector<1x4x256xf32>
    %4 = vector.shape_cast %3 : vector<1x4x256xf32> to vector<4x256xf32>
    %c0_3 = arith.constant 0 : index
    %c0_4 = arith.constant 0 : index
    %5 = vector.load %arg5[%c0_3, %c0_4] : memref<4x1xf32, #tpu.memory_space<vmem>>, vector<4x1xf32>
    %cst = arith.constant dense<0.000000e+00> : vector<4xf32>
    %6 = vector.multi_reduction <add>, %4, %cst [1] : vector<4x256xf32> to vector<4xf32>
    %7 = vector.shape_cast %6 : vector<4xf32> to vector<4x1xf32>
    %8 = arith.addf %5, %7 : vector<4x1xf32>
    %c0_5 = arith.constant 0 : index
    %c0_6 = arith.constant 0 : index
    %9 = vector.load %arg5[%c0_5, %c0_6] : memref<4x1xf32, #tpu.memory_space<vmem>>, vector<4x1xf32>
    tpu.vector_store %arg5[%c0_5, %c0_6], %8 {strides = array<i32>} : memref<4x1xf32, #tpu.memory_space<vmem>>, vector<4x1xf32>,
    %c0_7 = arith.constant 0 : index
    %c0_8 = arith.constant 0 : index
    %10 = vector.load %arg6[%c0_7, %c0_8] : memref<4x1xf32, #tpu.memory_space<vmem>>, vector<4x1xf32>
    %11 = arith.mulf %4, %4 : vector<4x256xf32>
    %cst_9 = arith.constant dense<0.000000e+00> : vector<4xf32>
    %12 = vector.multi_reduction <add>, %11, %cst_9 [1] : vector<4x256xf32> to vector<4xf32>
    %13 = vector.shape_cast %12 : vector<4xf32> to vector<4x1xf32>
    %14 = arith.addf %10, %13 : vector<4x1xf32>
    %c0_10 = arith.constant 0 : index
    %c0_11 = arith.constant 0 : index
    %15 = vector.load %arg6[%c0_10, %c0_11] : memref<4x1xf32, #tpu.memory_space<vmem>>, vector<4x1xf32>
    tpu.vector_store %arg6[%c0_10, %c0_11], %14 {strides = array<i32>} : memref<4x1xf32, #tpu.memory_space<vmem>>, vector<4x1xf32>,
    %c0_i32_12 = arith.constant 0 : i32
    %16 = arith.cmpi eq, %arg1, %c0_i32_12 : i32
    %17 = arith.extui %16 : i1 to i32
    %c0_i32_13 = arith.constant 0 : i32
    %18 = arith.cmpi ne, %17, %c0_i32_13 : i32
    scf.if %18 {
      %c0_14 = arith.constant 0 : index
      %c0_15 = arith.constant 0 : index
      %19 = vector.load %arg5[%c0_14, %c0_15] : memref<4x1xf32, #tpu.memory_space<vmem>>, vector<4x1xf32>
      %cst_16 = arith.constant 3.906250e-03 : f32
      %20 = vector.broadcast %cst_16 : f32 to vector<4x1xf32>
      %21 = arith.mulf %19, %20 : vector<4x1xf32>
      %c0_17 = arith.constant 0 : index
      %c0_18 = arith.constant 0 : index
      %22 = vector.load %arg6[%c0_17, %c0_18] : memref<4x1xf32, #tpu.memory_space<vmem>>, vector<4x1xf32>
      %cst_19 = arith.constant 3.906250e-03 : f32
      %23 = vector.broadcast %cst_19 : f32 to vector<4x1xf32>
      %24 = arith.mulf %22, %23 : vector<4x1xf32>
      %25 = arith.mulf %21, %21 : vector<4x1xf32>
      %26 = arith.subf %24, %25 : vector<4x1xf32>
      %c0_20 = arith.constant 0 : index
      %c0_21 = arith.constant 0 : index
      %c0_22 = arith.constant 0 : index
      %27 = vector.load %arg3[%c0_20, %c0_21, %c0_22] : memref<1x4x1xf32, #tpu.memory_space<vmem>>, vector<1x4x1xf32>
      %28 = vector.shape_cast %27 : vector<1x4x1xf32> to vector<4x1xf32>
      %29 = vector.shape_cast %21 : vector<4x1xf32> to vector<1x4x1xf32>
      tpu.vector_store %arg3[%c0_20, %c0_21, %c0_22], %29 {strides = array<i32>} : memref<1x4x1xf32, #tpu.memory_space<vmem>>, vector<1x4x1xf32>,
      %cst_23 = arith.constant 0.000000e+00 : f32
      %30 = vector.broadcast %cst_23 : f32 to vector<4x1xf32>
      %31 = arith.maximumf %26, %30 : vector<4x1xf32>
      %cst_24 = arith.constant 9.99999974E-6 : f32
      %32 = vector.broadcast %cst_24 : f32 to vector<4x1xf32>
      %33 = arith.addf %31, %32 : vector<4x1xf32>
      %34 = math.rsqrt %33 : vector<4x1xf32>
      %c0_25 = arith.constant 0 : index
      %c0_26 = arith.constant 0 : index
      %c0_27 = arith.constant 0 : index
      %35 = vector.load %arg4[%c0_25, %c0_26, %c0_27] : memref<1x4x1xf32, #tpu.memory_space<vmem>>, vector<1x4x1xf32>
      %36 = vector.shape_cast %35 : vector<1x4x1xf32> to vector<4x1xf32>
      %37 = vector.shape_cast %34 : vector<4x1xf32> to vector<1x4x1xf32>
      tpu.vector_store %arg4[%c0_25, %c0_26, %c0_27], %37 {strides = array<i32>} : memref<1x4x1xf32, #tpu.memory_space<vmem>>, vector<1x4x1xf32>,
    } else {
    }
    return
  }
  func.func @transform_0(%arg0: i32, %arg1: i32) -> (i32, i32, i32) {
    %c0_i32 = arith.constant 0 : i32
    %c0_i32_0 = arith.constant 0 : i32
    return %arg0, %c0_i32, %arg1 : i32, i32, i32
  }
  func.func @transform_1(%arg0: i32, %arg1: i32) -> (i32, i32, i32) {
    %c0_i32 = arith.constant 0 : i32
    %c0_i32_0 = arith.constant 0 : i32
    %c0_i32_1 = arith.constant 0 : i32
    return %arg0, %c0_i32, %c0_i32_0 : i32, i32, i32
  }
  func.func @transform_2(%arg0: i32, %arg1: i32) -> (i32, i32, i32) {
    %c0_i32 = arith.constant 0 : i32
    %c0_i32_0 = arith.constant 0 : i32
    %c0_i32_1 = arith.constant 0 : i32
    return %arg0, %c0_i32, %c0_i32_0 : i32, i32, i32
  }
}

</mosaic_0001>

<llo_original>
// kernel: tpu_custom_call.1
$region0: #{tpu_custom_call.1}
  #allocation0 [shape = 'u32[]', space=smem, size = 0x4, offset = 0x4, fixed_abs, tag = 'smem constant byte address 0x4 - core index']
  #allocation1 [shape = 'u32[144,128]{1,0:T(1,128)}', space=vmem, size = 0x12000, scoped, tag = 'internal scratch']
  #allocation2 [shape = 'f32[4,1]{1,0:T(4,128)}', space=vmem, size = 0x800, scoped, tag = 'scratch operand']
  #allocation3 [shape = 'f32[4,1]{1,0:T(4,128)}', space=vmem, size = 0x800, scoped, tag = 'scratch operand']
  %s0 = inlined_call_operand.hbm [shape: f32[2,4,256], index: 0, kind: input, shape index: {}]
  %s1 = inlined_call_operand.vmem [shape: f32[2,4,1], index: 1, kind: output, shape index: {0}]
  %s2 = inlined_call_operand.vmem [shape: f32[2,4,1], index: 2, kind: output, shape index: {1}]
  %3 = xla_tuple %s1, %s2
  %s4 = sld [smem:[#allocation0]]
  $region57: #{tpu_custom_call.1} parent=0
    _
  %s6 = ssub.s32 1, %s4
  %s7 = scalar_select 0, %s6, %s4
  $region1: #{tpu_custom_call.1} parent=0
    #allocation4 [shape = 'u8[8192]{0}', space=vmem, size = 0x2000, scoped, tag = 'input window, operand 0']
    #allocation5 [shape = 's32[2]{0}', space=sflag, size = 0x8, scoped, tag = 'scoped memory for tpu_custom_call.1']
    %8 = vsyncpa [#allocation5], 0
    %s9 = scalar_lea.sflag [#allocation5], 1
    %10 = vsyncpa %s9, 0
    loop: start=0, step=1, limit=4
    $region2: #{tpu_custom_call.1} parent=1 // loop_pre_header
      _
    $region3: #{tpu_custom_call.1} parent=1 // loop_header
      %s12 = sphi 0, %s16
      %p13 = scmp.ge.s32.totalorder %s12, 4
      %s19 = sphi 0, %s31
      %s20 = sphi 0, %s27
      %s21 = sphi 0, %s19
      %s22 = sphi 0, %s20
      %s23 = sphi 0, %s21
      %s24 = sphi 0, %s22
      %s36 = sphi 0, %s38
      %s39 = sphi 0, %s36
      %s40 = sphi 0, %s39
      %s56 = sphi 0, %s40
      %s62 = sphi 0, %s64
      %s65 = sphi 0, %s62
      %s66 = sphi 0, %s65
      %s82 = sphi 0, %s66
      %s88 = sphi 0, %s90
      %s91 = sphi 0, %s88
      %s92 = sphi 0, %s91
      %s108 = sphi 0, %s92
    $region4: #{tpu_custom_call.1} parent=1 // loop_header_branch
      %15 = sbr.rel (%p13) target = $region8
    $region5: #{tpu_custom_call.1} parent=1 // loop_body
      %s17 = ssub.s32 %s12, 1
      %s18 = ssub.s32 %s12, 2
      %s25 = sadd.s32 1, %s20
      %p26 = scmp.ge.s32.totalorder %s25, 1
      %s27 = scalar_select %p26, 0, %s25
      %s28 = sadd.s32 1, %s19
      %s29 = scalar_select %p26, %s28, %s19
      %p30 = scmp.ge.s32.totalorder %s29, 2
      %s31 = scalar_select %p30, 0, %s29
      %s32 = ssub.s32 %s19, %s31
      %s33 = ssub.s32 %s20, %s27
      %s34 = sor.u32 %s32, %s33
      %p35 = scmp.eq.s32.totalorder %s34, 0
      %s37 = sadd.s32 %s36, 1
      %s38 = scalar_select %p35, %s36, %s37
      %p41 = pneg %p35
      %p42 = scmp.eq.s32.totalorder %s12, 1
      %p43 = por %p41, %p42
      %p44 = scmp.ne.s32.totalorder %s36, %s39
      %p45 = scmp.eq.s32.totalorder %s12, 0
      %p46 = por %p44, %p45
      %p47 = scmp.ne.s32.totalorder %s36, %s39
      %p48 = scmp.eq.s32.totalorder %s17, 1
      %p49 = por %p47, %p48
      %p50 = scmp.ne.s32.totalorder %s39, %s40
      %p51 = scmp.eq.s32.totalorder %s17, 0
      %p52 = por %p50, %p51
      %p53 = scmp.ne.s32.totalorder %s39, %s40
      %p54 = scmp.eq.s32.totalorder %s18, 1
      %p55 = por %p53, %p54
      %p57 = scmp.ne.s32.totalorder %s40, %s56
      %p58 = scmp.eq.s32.totalorder %s18, 0
      %p59 = por %p57, %p58
      %s60 = ssub.s32 %s19, %s31
      %p61 = scmp.eq.s32.totalorder %s60, 0
      %s63 = sadd.s32 %s62, 1
      %s64 = scalar_select %p61, %s62, %s63
      %p67 = pneg %p61
      %p68 = scmp.eq.s32.totalorder %s12, 1
      %p69 = por %p67, %p68
      %p70 = scmp.ne.s32.totalorder %s62, %s65
      %p71 = scmp.eq.s32.totalorder %s12, 0
      %p72 = por %p70, %p71
      %p73 = scmp.ne.s32.totalorder %s62, %s65
      %p74 = scmp.eq.s32.totalorder %s17, 1
      %p75 = por %p73, %p74
      %p76 = scmp.ne.s32.totalorder %s65, %s66
      %p77 = scmp.eq.s32.totalorder %s17, 0
      %p78 = por %p76, %p77
      %p79 = scmp.ne.s32.totalorder %s65, %s66
      %p80 = scmp.eq.s32.totalorder %s18, 1
      %p81 = por %p79, %p80
      %p83 = scmp.ne.s32.totalorder %s66, %s82
      %p84 = scmp.eq.s32.totalorder %s18, 0
      %p85 = por %p83, %p84
      %s86 = ssub.s32 %s19, %s31
      %p87 = scmp.eq.s32.totalorder %s86, 0
      %s89 = sadd.s32 %s88, 1
      %s90 = scalar_select %p87, %s88, %s89
      %p93 = pneg %p87
      %p94 = scmp.eq.s32.totalorder %s12, 1
      %p95 = por %p93, %p94
      %p96 = scmp.ne.s32.totalorder %s88, %s91
      %p97 = scmp.eq.s32.totalorder %s12, 0
      %p98 = por %p96, %p97
      %p99 = scmp.ne.s32.totalorder %s88, %s91
      %p100 = scmp.eq.s32.totalorder %s17, 1
      %p101 = por %p99, %p100
      %p102 = scmp.ne.s32.totalorder %s91, %s92
      %p103 = scmp.eq.s32.totalorder %s17, 0
      %p104 = por %p102, %p103
      %p105 = scmp.ne.s32.totalorder %s91, %s92
      %p106 = scmp.eq.s32.totalorder %s18, 1
      %p107 = por %p105, %p106
      %p109 = scmp.ne.s32.totalorder %s92, %s108
      %p110 = scmp.eq.s32.totalorder %s18, 0
      %p111 = por %p109, %p110
      %p112 = scmp.le.s32.totalorder 1, %s12
      %p113 = scmp.lt.s32.totalorder %s12, 3
      %p114 = pnand %p112, %p113
      %p115 = pneg %p114
      // Predicated region
      $region9: #{tpu_custom_call.1} parent=5 // pred_check
        _
      $region10: #{tpu_custom_call.1} parent=5 // pred_check_branch
        %117 = sbr.rel (%p114) target = $region12
      $region11: #{tpu_custom_call.1} parent=5 // pred_region
        %s118 = ssub.s32 %s12, 1
      $region12: #{tpu_custom_call.1} parent=5 // pred_fallthru
        _
      %p119 = scmp.lt.s32.totalorder %s12, 2
      // Predicated region
      $region13: #{tpu_custom_call.1} parent=5 // pred_check
        %p120 = pneg %p119
      $region14: #{tpu_custom_call.1} parent=5 // pred_check_branch
        %122 = sbr.rel (%p120) target = $region16
      $region15: #{tpu_custom_call.1} parent=5 // pred_region
        // Predicated region
        $region17: #{tpu_custom_call.1} parent=15 // pred_check
          %p123 = pneg %p46
        $region18: #{tpu_custom_call.1} parent=15 // pred_check_branch
          %125 = sbr.rel (%p123) target = $region20
        $region19: #{tpu_custom_call.1} parent=15 // pred_region
          %s126 = sand.u32 %s36, 1
          %s127 = scalar_lea.sflag [#allocation5], %s126
          %s128 = sand.u32 %s36, 1
          %s129 = smul.addr %s128, 8
          %s130 = scalar_lea.vmem [#allocation4], %s129
          %s131 = smul.u32 2, %s20
          %s133 = ssub.s32 128, 128
          %134 = vsyncadd %s127, %s133
          %s135 = smul.addr %s19, 2
          %s136 = sadd.s32 %s131, %s135
          %s137 = smul.addr %s136, 64
          %s138 = scalar_lea.hbm %s0, %s137
          %s140 = sshll.u32 %s130, 4
          %s141 = int_to_ptr.vmem [resolvable:$true] %s140
          %143 = dma.hbm_to_vmem [thread:$0]  %s138, 128, %s141, %s127
        $region20: #{tpu_custom_call.1} parent=15 // pred_fallthru
          _
      $region16: #{tpu_custom_call.1} parent=5 // pred_fallthru
        _
      %p144 = scmp.le.s32.totalorder 1, %s12
      %p145 = scmp.lt.s32.totalorder %s12, 3
      %p146 = pnand %p144, %p145
      %p147 = pneg %p146
      // Predicated region
      $region21: #{tpu_custom_call.1} parent=5 // pred_check
        _
      $region22: #{tpu_custom_call.1} parent=5 // pred_check_branch
        %149 = sbr.rel (%p146) target = $region24
      $region23: #{tpu_custom_call.1} parent=5 // pred_region
        %s150 = ssub.s32 %s12, 1
        %s151 = sand.u32 %s39, 1
        %s152 = scalar_lea.sflag [#allocation5], %s151
        %s153 = sand.u32 %s39, 1
        %s154 = smul.addr %s153, 8
        %s155 = scalar_lea.vmem [#allocation4], %s154
        // Predicated region
        $region25: #{tpu_custom_call.1} parent=23 // pred_check
          %p156 = pneg %p52
        $region26: #{tpu_custom_call.1} parent=23 // pred_check_branch
          %158 = sbr.rel (%p156) target = $region28
        $region27: #{tpu_custom_call.1} parent=23 // pred_region
          %159 = dma.done %s152, 128
        $region28: #{tpu_custom_call.1} parent=23 // pred_fallthru
          _
        %s160 = sand.u32 %s39, 1
        %s161 = scalar_lea.sflag [#allocation5], %s160
        %s162 = sand.u32 %s39, 1
        %s163 = smul.addr %s162, 8
        %s164 = scalar_lea.vmem [#allocation4], %s163
        %p165 = pneg %p52
        %p166 = pneg %p49
        %p167 = pneg %p78
        %p168 = pneg %p75
        %p169 = scmp.lt.s32.totalorder %s21, 1
        %s170 = scalar_select %p169, %s21, 1
        %s171 = smul.addr %s170, 4
        %s172 = scalar_lea.vmem %s1, %s171
        %p173 = pneg %p104
        %p174 = pneg %p101
        %p175 = scmp.lt.s32.totalorder %s21, 1
        %s176 = scalar_select %p175, %s21, 1
        %s177 = smul.addr %s176, 4
        %s178 = scalar_lea.vmem %s2, %s177
        %s179 = smul.u32 2, %s22
        %p180 = scmp.lt.s32.totalorder %s21, 1
        %s181 = scalar_select %p180, %s21, 1
        %s182 = smul.addr %s181, 4
        %s183 = scalar_lea.vmem %s1, %s182
        %p184 = scmp.lt.s32.totalorder %s21, 1
        %s185 = scalar_select %p184, %s21, 1
        %s186 = smul.addr %s185, 4
        %s187 = scalar_lea.vmem %s2, %s186
        %p188 = scmp.eq.s32.totalorder %s22, 0
        // Predicated region
        $region29: #{tpu_custom_call.1} parent=23 // pred_check
          %p189 = pneg %p188
        $region30: #{tpu_custom_call.1} parent=23 // pred_check_branch
          %191 = sbr.rel (%p189) target = $region32
        $region31: #{tpu_custom_call.1} parent=23 // pred_region
          %vm192 = vcmask 3072
          %193 = vst.msk [vmem:[#allocation2] sm:$0xf] %vm192, 0.0
          %194 = vst.msk [vmem:[#allocation3] sm:$0xf] %vm192, 0.0
        $region32: #{tpu_custom_call.1} parent=23 // pred_fallthru
          _
        %v195 = vld [vmem:[%s155] sm:$0xff]
        %v196 = vld [vmem:[#allocation2] sm:$0xf]
        %v198 = vcombine.high %v195, %v195
        %vm200 = vcmask 1043456
        %v201 = vsel %vm200, %v195, 0.0
        %v202 = vsel %vm200, %v198, 0.0
        %v203 = vadd.f32 %v201, %v202
        %204 = vadd.xlane.f32.xlu0 %v203
        %v205 = vpop.xlane.xlu0 %204
        %v206 = vadd.f32 %v196, %v205
        %vm207 = vcmask 3072
        %208 = vst.msk [vmem:[#allocation2] sm:$0xf] %vm207, %v206
        %v209 = vld [vmem:[#allocation3] sm:$0xf]
        %v210 = vmul.f32 %v195, %v195
        %v212 = vcombine.high %v210, %v210
        %v214 = vsel %vm200, %v210, 0.0
        %v215 = vsel %vm200, %v212, 0.0
        %v216 = vadd.f32 %v214, %v215
        %217 = vadd.xlane.f32.xlu0 %v216
        %v218 = vpop.xlane.xlu0 %217
        %v219 = vadd.f32 %v209, %v218
        %220 = vst.msk [vmem:[#allocation3] sm:$0xf] %vm207, %v219
        // Predicated region
        $region33: #{tpu_custom_call.1} parent=23 // pred_check
          %p221 = pneg %p188
        $region34: #{tpu_custom_call.1} parent=23 // pred_check_branch
          %223 = sbr.rel (%p221) target = $region36
        $region35: #{tpu_custom_call.1} parent=23 // pred_region
          %v224 = vld [vmem:[#allocation2] sm:$0xf]
          %v225 = vmul.f32 %v224, 0.00390625
          %v226 = vld [vmem:[#allocation3] sm:$0xf]
          %v227 = vmul.f32 %v226, 0.00390625
          %v228 = vmul.f32 %v225, %v225
          %v229 = vsub.f32 %v227, %v228
          %230 = vst.msk [vmem:[%s183] sm:$0xf] %vm207, %v225
          %v231 = vmax.f32 %v229, 0.0
          %v232 = vadd.f32 %v231, 1e-05
          %v233 = vrsqrt.pop %v232
          %234 = vst.msk [vmem:[%s187] sm:$0xf] %vm207, %v233
        $region36: #{tpu_custom_call.1} parent=23 // pred_fallthru
          _
        %p235 = scmp.lt.s32.totalorder %s21, 1
        %s236 = scalar_select %p235, %s21, 1
        %s237 = smul.addr %s236, 4
        %s238 = scalar_lea.vmem %s1, %s237
        %p239 = scmp.lt.s32.totalorder %s21, 1
        %s240 = scalar_select %p239, %s21, 1
        %s241 = smul.addr %s240, 4
        %s242 = scalar_lea.vmem %s2, %s241
        // Predicated region
        $region37: #{tpu_custom_call.1} parent=23 // pred_check
          %p243 = pneg %p75
        $region38: #{tpu_custom_call.1} parent=23 // pred_check_branch
          %245 = sbr.rel (%p243) target = $region40
        $region39: #{tpu_custom_call.1} parent=23 // pred_region
          _
        $region40: #{tpu_custom_call.1} parent=23 // pred_fallthru
          _
        // Predicated region
        $region41: #{tpu_custom_call.1} parent=23 // pred_check
          %p246 = pneg %p101
        $region42: #{tpu_custom_call.1} parent=23 // pred_check_branch
          %248 = sbr.rel (%p246) target = $region44
        $region43: #{tpu_custom_call.1} parent=23 // pred_region
          _
        $region44: #{tpu_custom_call.1} parent=23 // pred_fallthru
          _
      $region24: #{tpu_custom_call.1} parent=5 // pred_fallthru
        _
      %p249 = scmp.le.s32.totalorder 2, %s12
      // Predicated region
      $region45: #{tpu_custom_call.1} parent=5 // pred_check
        %p250 = pneg %p249
      $region46: #{tpu_custom_call.1} parent=5 // pred_check_branch
        %252 = sbr.rel (%p250) target = $region48
      $region47: #{tpu_custom_call.1} parent=5 // pred_region
        %s253 = ssub.s32 %s12, 2
        // Predicated region
        $region49: #{tpu_custom_call.1} parent=47 // pred_check
          %p254 = pneg %p81
        $region50: #{tpu_custom_call.1} parent=47 // pred_check_branch
          %256 = sbr.rel (%p254) target = $region52
        $region51: #{tpu_custom_call.1} parent=47 // pred_region
          %p257 = scmp.lt.s32.totalorder %s23, 1
          %s258 = scalar_select %p257, %s23, 1
          %s259 = smul.addr %s258, 4
          %s260 = scalar_lea.vmem %s1, %s259
        $region52: #{tpu_custom_call.1} parent=47 // pred_fallthru
          _
        // Predicated region
        $region53: #{tpu_custom_call.1} parent=47 // pred_check
          %p261 = pneg %p107
        $region54: #{tpu_custom_call.1} parent=47 // pred_check_branch
          %263 = sbr.rel (%p261) target = $region56
        $region55: #{tpu_custom_call.1} parent=47 // pred_region
          %p264 = scmp.lt.s32.totalorder %s23, 1
          %s265 = scalar_select %p264, %s23, 1
          %s266 = smul.addr %s265, 4
          %s267 = scalar_lea.vmem %s2, %s266
        $region56: #{tpu_custom_call.1} parent=47 // pred_fallthru
          _
      $region48: #{tpu_custom_call.1} parent=5 // pred_fallthru
        _
    $region6: #{tpu_custom_call.1} parent=1 // loop_footer
      %s16 = sadd.s32 1, %s12
    $region7: #{tpu_custom_call.1} parent=1 // loop_footer_branch
      %11 = sbr.rel target = $region3
    $region8: #{tpu_custom_call.1} parent=1 // loop_exit
      _
    %268 = vsyncpa [#allocation5], 1
    %s269 = scalar_lea.sflag [#allocation5], 1
    %270 = vsyncpa %s269, 1

</llo_original>
